<compile_context>
chip_gen: v5e
topology: v5e:2x2
jax: 0.10.0
libtpu: 0.0.40
codegen_flags: <defaults>
</compile_context>

<pallas_src>
import functools

import jax
import jax.numpy as jnp
from jax import lax
from jax.experimental import pallas as pl
from jax.experimental.pallas import tpu as pltpu

MAX_STATE_DIM = 6
MAX_ACTION_DIM = 3

_S_PAD = 8          # state dim padded 6 -> 8; lane 6 carries a constant 1.0 (folded b1)
_OUT_PAD = 8        # output lanes: actions in lanes 0..2, lanes 3..7 masked via b3 = -1e9
_LANES = 128        # lane width of the hidden dim and the packed param slab
_TILE_B = 2048      # max batch rows per grid step
_CHUNK_B = 256      # max rows per in-kernel sub-chunk (bounds vreg live ranges)
_NEG_MASK = -1e9    # finite "minus infinity" baked into b3 pad lanes

# Row offsets inside the packed parameter slab ([_PARAM_ROWS, _LANES] f32):
_W1_ROW = 0                    # [  0,   8): rows 0-5 = w1 (6 x H), row 6 = b1 (folded)
_W2_ROW = _S_PAD               # [  8, 136): w2 (H x H, zero padded)
_W3_ROW = _S_PAD + _LANES      # [136, 264): w3 (H x 3, zero padded)
_B2_ROW = _S_PAD + 2 * _LANES  # 264: b2
_B3_ROW = _B2_ROW + 1          # 265: b3 (lanes >= MAX_ACTION_DIM hold -1e9)
_PARAM_ROWS = _B2_ROW + 8      # 272 (sublane aligned)


def _round_up(v, m):
    return ((v + m - 1) // m) * m


def _tile_plan(batch, tile_b, chunk_max):
    """Return (b_pad, tb, chunk): padded batch, rows per grid step, rows per sub-chunk.

    Keeps padding small (chunk size adapts to the batch), keeps >= 2 grid steps
    when there is enough work (v7x megacore), and keeps tb an exact multiple of
    chunk so the in-kernel loop never runs off the tile.
    """
    b8 = _round_up(max(batch, 1), 8)
    if b8 <= chunk_max:
        return b8, b8, b8                       # single tile, single chunk
    n_chunks = pl.cdiv(b8, chunk_max)
    chunk = _round_up(pl.cdiv(b8, n_chunks), 8)  # <= chunk_max, 8-row aligned
    chunks_per_tile = max(1, tile_b // chunk)
    if n_chunks >= 2:                            # give both TCs work on v7x
        chunks_per_tile = min(chunks_per_tile, pl.cdiv(n_chunks, 2))
    chunks_per_tile = min(chunks_per_tile, n_chunks)
    tb = chunks_per_tile * chunk
    grid = pl.cdiv(n_chunks, chunks_per_tile)
    return grid * tb, tb, chunk


def _mlp_softmax_kernel(x_ref, p_ref, o_ref, *, chunk, n_chunks):
    """Fused 3-layer MLP + softmax, processed in row sub-chunks."""
    f32 = jnp.float32
    w1 = p_ref[_W1_ROW:_W1_ROW + _S_PAD, :]             # [8,   128]  (row 6 = b1)
    w2 = p_ref[_W2_ROW:_W2_ROW + _LANES, :]             # [128, 128]
    w3 = p_ref[_W3_ROW:_W3_ROW + _LANES, :]             # [128, 128]  (lanes >= 3 zero)
    b2 = p_ref[_B2_ROW:_B2_ROW + 1, :].astype(f32)      # [1,   128]
    b3 = p_ref[_B3_ROW:_B3_ROW + 1, :].astype(f32)[:, :_OUT_PAD]   # [1, 8], mask baked in

    def body(i, carry):
        off = pl.multiple_of(i * chunk, chunk)
        x = x_ref[pl.ds(off, chunk), :]                              # [chunk, 8]
        # Layer 1: bias folded into w1 (x lane 6 == 1.0). MXU accumulates in f32,
        # ReLU/softmax math stays f32 (no bf16 VPU/EUP on v5e).
        h1 = jnp.maximum(jnp.dot(x, w1, preferred_element_type=f32), 0.0)
        h2 = jnp.dot(h1.astype(w2.dtype), w2, preferred_element_type=f32) + b2
        h2 = jnp.maximum(h2, 0.0)
        logits = jnp.dot(h2.astype(w3.dtype), w3,
                         preferred_element_type=f32)[:, :_OUT_PAD] + b3   # [chunk, 8]
        # Lanes >= MAX_ACTION_DIM carry -1e9 (from b3): exp underflows to 0, so
        # no iota/where masking is needed.
        m = jnp.max(logits, axis=-1, keepdims=True)
        e = jnp.exp(logits - m)
        probs = e / jnp.sum(e, axis=-1, keepdims=True)   # exact: rows sum to 1
        o_ref[pl.ds(off, chunk), :] = probs.astype(o_ref.dtype)
        return carry

    lax.fori_loop(0, n_chunks, body, 0, unroll=True)


@functools.partial(jax.jit, static_argnames=("compute_dtype", "tile_b"))
def unified_policy_forward(x, packed_params, *, compute_dtype=jnp.bfloat16,
                           tile_b=_TILE_B):
    """softmax(Linear(ReLU(Linear(ReLU(Linear(x)))))), matching the PyTorch module."""
    B = x.shape[0]
    b_pad, tb, chunk = _tile_plan(B, tile_b, _CHUNK_B)

    # Pad features 6 -> 8; lane 6 is the constant-1 bias lane (b1 folded into w1).
    x_p = jnp.zeros((b_pad, _S_PAD), compute_dtype)
    x_p = x_p.at[:, MAX_STATE_DIM].set(1.0)
    x_p = x_p.at[:B, :MAX_STATE_DIM].set(x.astype(compute_dtype))
    params = packed_params.astype(compute_dtype)   # bf16 operands on v6e/v7x

    kernel = functools.partial(_mlp_softmax_kernel, chunk=chunk,
                               n_chunks=tb // chunk)
    out = pl.pallas_call(
        kernel,
        out_shape=jax.ShapeDtypeStruct((b_pad, _OUT_PAD), jnp.float32),
        grid=(b_pad // tb,),
        in_specs=[
            pl.BlockSpec((tb, _S_PAD), lambda i: (i, 0)),            # x streams / double-buffers
            pl.BlockSpec((_PARAM_ROWS, _LANES), lambda i: (0, 0)),   # params stay resident
        ],
        out_specs=pl.BlockSpec((tb, _OUT_PAD), lambda i: (i, 0)),    # narrow 8-lane writeback
        compiler_params=pltpu.CompilerParams(
            dimension_semantics=("parallel",)),
    )(x_p, params)
    return out[:B, :MAX_ACTION_DIM]


def pack_params(w1, b1, w2, b2, w3, b3):
    """Pack all params into one lane-dense [272, 128] f32 slab (one resident DMA).

    b1 is folded into row 6 of the w1 block (the wrapper feeds 1.0 on input lane 6)
    and the softmax action mask is baked into b3 (lanes >= MAX_ACTION_DIM = -1e9).
    """
    H = w1.shape[1]
    assert w1.shape == (MAX_STATE_DIM, H)
    # TODO(synk): packing assumes hidden_size <= 128; larger H needs a multi-slab layout.
    assert H <= _LANES, "hidden_size must be <= 128 for this packing"
    p = jnp.zeros((_PARAM_ROWS, _LANES), jnp.float32)
    p = p.at[_W1_ROW:_W1_ROW + MAX_STATE_DIM, :H].set(w1)
    p = p.at[_W1_ROW + MAX_STATE_DIM, :H].set(b1.reshape(-1))     # folded b1
    p = p.at[_W2_ROW:_W2_ROW + H, :H].set(w2)
    p = p.at[_W3_ROW:_W3_ROW + H, :MAX_ACTION_DIM].set(w3)
    p = p.at[_B2_ROW, :H].set(b2.reshape(-1))
    p = p.at[_B3_ROW, MAX_ACTION_DIM:_OUT_PAD].set(_NEG_MASK)     # baked softmax mask
    p = p.at[_B3_ROW, :MAX_ACTION_DIM].set(b3.reshape(-1))
    return p


def init_params(key, hidden_size):
    """Deterministic init mimicking nn.Linear default (uniform +-1/sqrt(fan_in))."""
    ks = jax.random.split(key, 6)

    def linear(kw, kb, fan_in, fan_out):
        bound = 1.0 / jnp.sqrt(jnp.float32(fan_in))
        w = jax.random.uniform(kw, (fan_in, fan_out), jnp.float32, -bound, bound)
        b = jax.random.uniform(kb, (1, fan_out), jnp.float32, -bound, bound)
        return w, b

    w1, b1 = linear(ks[0], ks[1], MAX_STATE_DIM, hidden_size)
    w2, b2 = linear(ks[2], ks[3], hidden_size, hidden_size)
    w3, b3 = linear(ks[4], ks[5], hidden_size, MAX_ACTION_DIM)
    return w1, b1, w2, b2, w3, b3


def _reference(x, w1, b1, w2, b2, w3, b3):
    h1 = jax.nn.relu(x @ w1 + b1)
    h2 = jax.nn.relu(h1 @ w2 + b2)
    return jax.nn.softmax(h2 @ w3 + b3, axis=-1)


if __name__ == "__main__":
    key = jax.random.PRNGKey(0)
    k_x, k_p, k_x2 = jax.random.split(key, 3)

    hidden_size = 32
    raw = init_params(k_p, hidden_size)
    packed = pack_params(*raw)

    # --- small batch, f32 operand path (tight tolerance) ---
    batch = 8
    x = jax.random.normal(k_x, (batch, MAX_STATE_DIM), jnp.float32)
    ref = _reference(x, *raw)
    out = jax.block_until_ready(
        unified_policy_forward(x, packed, compute_dtype=jnp.float32))
    assert out.shape == (batch, MAX_ACTION_DIM)
    assert jnp.allclose(out, ref, atol=1e-4, rtol=1e-4)
    assert jnp.allclose(jnp.sum(out, axis=-1), 1.0, atol=1e-4)

    # --- small batch, default bf16 operands (f32 accumulation + f32 softmax) ---
    out_bf16 = jax.block_until_ready(unified_policy_forward(x, packed))
    assert out_bf16.shape == (batch, MAX_ACTION_DIM)
    assert jnp.allclose(out_bf16, ref, atol=5e-2, rtol=5e-2)
    assert jnp.allclose(jnp.sum(out_bf16, axis=-1), 1.0, atol=1e-3)

    # --- larger batch: exercises the multi-step grid + in-kernel chunk loop ---
    batch2 = 600
    x2 = jax.random.normal(k_x2, (batch2, MAX_STATE_DIM), jnp.float32)
    ref2 = _reference(x2, *raw)
    out2 = jax.block_until_ready(unified_policy_forward(x2, packed))
    assert out2.shape == (batch2, MAX_ACTION_DIM)
    assert jnp.allclose(out2, ref2, atol=5e-2, rtol=5e-2)
    assert jnp.allclose(jnp.sum(out2, axis=-1), 1.0, atol=1e-3)

    print("KERNEL_OK")
</pallas_src>

<mosaic_0001>
module attributes {stable_mosaic.version = 11 : i64} {
  func.func @_mlp_softmax_kernel(%arg0: i32, %arg1: memref<8x8xf32, #tpu.memory_space<vmem>>, %arg2: memref<272x128xf32, #tpu.memory_space<vmem>>, %arg3: memref<8x8xf32, #tpu.memory_space<vmem>>) attributes {dimension_semantics = [#tpu.dimension_semantics<parallel>], iteration_bounds = array<i64: 1>, scalar_prefetch = 0 : i64, scratch_operands = 0 : i64, tpu.core_type = #tpu.core_type<tc>, window_params = [{transform_indices = @transform_0, window_bounds = array<i64: 8, 8>}, {pipeline_mode = #tpu.pipeline_mode<synchronous>, transform_indices = @transform_1, window_bounds = array<i64: 272, 128>}, {transform_indices = @transform_2, window_bounds = array<i64: 8, 8>}]} {
    %c0 = arith.constant 0 : index
    %c0_0 = arith.constant 0 : index
    %0 = vector.load %arg2[%c0, %c0_0] : memref<272x128xf32, #tpu.memory_space<vmem>>, vector<8x128xf32>
    %c8 = arith.constant 8 : index
    %c0_1 = arith.constant 0 : index
    %1 = vector.load %arg2[%c8, %c0_1] : memref<272x128xf32, #tpu.memory_space<vmem>>, vector<128x128xf32>
    %c136 = arith.constant 136 : index
    %c0_2 = arith.constant 0 : index
    %2 = vector.load %arg2[%c136, %c0_2] : memref<272x128xf32, #tpu.memory_space<vmem>>, vector<128x128xf32>
    %c264 = arith.constant 264 : index
    %c0_3 = arith.constant 0 : index
    %3 = vector.load %arg2[%c264, %c0_3] : memref<272x128xf32, #tpu.memory_space<vmem>>, vector<1x128xf32>
    %c265 = arith.constant 265 : index
    %c0_4 = arith.constant 0 : index
    %4 = vector.load %arg2[%c265, %c0_4] : memref<272x128xf32, #tpu.memory_space<vmem>>, vector<1x128xf32>
    %5 = vector.extract_strided_slice %4 {offsets = [0, 0], sizes = [1, 8], strides = [1, 1]} : vector<1x128xf32> to vector<1x8xf32>
    %c0_i32 = arith.constant 0 : i32
    %c8_i32 = arith.constant 8 : i32
    %6 = arith.muli %c0_i32, %c8_i32 : i32
    %7 = tpu.assume_multiple %6, 8 : i32
    %8 = arith.index_cast %7 : i32 to index
    %c0_5 = arith.constant 0 : index
    %9 = vector.load %arg1[%8, %c0_5] : memref<8x8xf32, #tpu.memory_space<vmem>>, vector<8x8xf32>
    %cst = arith.constant dense<0.000000e+00> : vector<8x128xf32>
    %10 = tpu.matmul %9, %0, %cst {dimension_numbers = #tpu.dot_dimension_numbers<[1], [0], [0], [1], [0, 0, 1, 1], [], []>} : vector<8x8xf32>, vector<8x128xf32>, vector<8x128xf32> -> vector<8x128xf32>
    %cst_6 = arith.constant 0.000000e+00 : f32
    %11 = vector.broadcast %cst_6 : f32 to vector<8x128xf32>
    %12 = arith.maximumf %10, %11 : vector<8x128xf32>
    %cst_7 = arith.constant dense<0.000000e+00> : vector<8x128xf32>
    %13 = tpu.matmul %12, %1, %cst_7 {dimension_numbers = #tpu.dot_dimension_numbers<[1], [0], [0], [1], [0, 0, 1, 1], [], []>} : vector<8x128xf32>, vector<128x128xf32>, vector<8x128xf32> -> vector<8x128xf32>
    %14 = vector.broadcast %3 : vector<1x128xf32> to vector<8x128xf32>
    %15 = arith.addf %13, %14 : vector<8x128xf32>
    %cst_8 = arith.constant 0.000000e+00 : f32
    %16 = vector.broadcast %cst_8 : f32 to vector<8x128xf32>
    %17 = arith.maximumf %15, %16 : vector<8x128xf32>
    %cst_9 = arith.constant dense<0.000000e+00> : vector<8x128xf32>
    %18 = tpu.matmul %17, %2, %cst_9 {dimension_numbers = #tpu.dot_dimension_numbers<[1], [0], [0], [1], [0, 0, 1, 1], [], []>} : vector<8x128xf32>, vector<128x128xf32>, vector<8x128xf32> -> vector<8x128xf32>
    %19 = vector.extract_strided_slice %18 {offsets = [0, 0], sizes = [8, 8], strides = [1, 1]} : vector<8x128xf32> to vector<8x8xf32>
    %20 = vector.broadcast %5 : vector<1x8xf32> to vector<8x8xf32>
    %21 = arith.addf %19, %20 : vector<8x8xf32>
    %cst_10 = arith.constant dense<0xFF800000> : vector<8xf32>
    %22 = vector.multi_reduction <maximumf>, %21, %cst_10 [1] : vector<8x8xf32> to vector<8xf32>
    %23 = vector.shape_cast %22 : vector<8xf32> to vector<8x1xf32>
    %24 = vector.broadcast %23 : vector<8x1xf32> to vector<8x8xf32>
    %25 = arith.subf %21, %24 : vector<8x8xf32>
    %26 = math.exp %25 : vector<8x8xf32>
    %cst_11 = arith.constant dense<0.000000e+00> : vector<8xf32>
    %27 = vector.multi_reduction <add>, %26, %cst_11 [1] : vector<8x8xf32> to vector<8xf32>
    %28 = vector.shape_cast %27 : vector<8xf32> to vector<8x1xf32>
    %29 = vector.broadcast %28 : vector<8x1xf32> to vector<8x8xf32>
    %30 = arith.divf %26, %29 : vector<8x8xf32>
    %31 = arith.index_cast %7 : i32 to index
    %c0_12 = arith.constant 0 : index
    %32 = vector.load %arg3[%31, %c0_12] : memref<8x8xf32, #tpu.memory_space<vmem>>, vector<8x8xf32>
    tpu.vector_store %arg3[%31, %c0_12], %30 {strides = array<i32>} : memref<8x8xf32, #tpu.memory_space<vmem>>, vector<8x8xf32>,
    %c1_i32 = arith.constant 1 : i32
    return
  }
  func.func @transform_0(%arg0: i32) -> (i32, i32) {
    %c0_i32 = arith.constant 0 : i32
    %c0_i32_0 = arith.constant 0 : i32
    return %arg0, %c0_i32 : i32, i32
  }
  func.func @transform_1(%arg0: i32) -> (i32, i32) {
    %c0_i32 = arith.constant 0 : i32
    %c0_i32_0 = arith.constant 0 : i32
    %c0_i32_1 = arith.constant 0 : i32
    return %c0_i32, %c0_i32_0 : i32, i32
  }
  func.func @transform_2(%arg0: i32) -> (i32, i32) {
    %c0_i32 = arith.constant 0 : i32
    %c0_i32_0 = arith.constant 0 : i32
    return %arg0, %c0_i32 : i32, i32
  }
}

</mosaic_0001>

<llo_original>
// kernel: unified_policy_forward.1
$region0: #{unified_policy_forward.1}
  #allocation0 [shape = 'u32[]', space=smem, size = 0x4, offset = 0x4, fixed_abs, tag = 'smem constant byte address 0x4 - core index']
  #allocation1 [shape = 'u32[72,128]{1,0:T(1,128)}', space=vmem, size = 0x9000, scoped, tag = 'internal scratch']
  %s0 = inlined_call_operand.vmem [shape: f32[8,8], index: 0, kind: input, shape index: {}]
  %s1 = inlined_call_operand.hbm [shape: f32[272,128], index: 1, kind: input, shape index: {}]
  %s2 = inlined_call_operand.vmem [shape: f32[8,8], index: 2, kind: output, shape index: {}]
  %s3 = sld [smem:[#allocation0]]
  $region22: #{unified_policy_forward.1} parent=0
    _
  %s5 = ssub.s32 1, %s3
  %s6 = scalar_select 0, %s5, %s3
  $region1: #{unified_policy_forward.1} parent=0
    #allocation2 [shape = 'u8[139264]{0}', space=vmem, size = 0x22000, scoped, tag = 'input window, operand 1, single buffered']
    #allocation3 [shape = 's32[1]{0}', space=sflag, size = 0x4, scoped, tag = 'scoped memory for unified_policy_forward.1']
    %7 = vsyncpa [#allocation3], 0
    // Predicated region
    $region2: #{unified_policy_forward.1} parent=1 // pred_check
      _
    $region3: #{unified_policy_forward.1} parent=1 // pred_check_branch
      %9 = sbr.rel (0) target = $region5
    $region4: #{unified_policy_forward.1} parent=1 // pred_region
      _
    $region5: #{unified_policy_forward.1} parent=1 // pred_fallthru
      _
    // Predicated region
    $region6: #{unified_policy_forward.1} parent=1 // pred_check
      _
    $region7: #{unified_policy_forward.1} parent=1 // pred_check_branch
      %11 = sbr.rel (0) target = $region9
    $region8: #{unified_policy_forward.1} parent=1 // pred_region
      %13 = vsyncadd [#allocation3], 0
      %s14 = sshll.u32 %s1, 4
      %s15 = int_to_ptr.hbm [resolvable:$true] %s14
      %s16 = sshll.u32 [#allocation2], 4
      %s17 = int_to_ptr.vmem [resolvable:$true] %s16
      %22 = dma.hbm_to_vmem [thread:$0]  %s15, 4352, %s17, [#allocation3], 128, 128, 8
    $region9: #{unified_policy_forward.1} parent=1 // pred_fallthru
      _
    // Predicated region
    $region10: #{unified_policy_forward.1} parent=1 // pred_check
      _
    $region11: #{unified_policy_forward.1} parent=1 // pred_check_branch
      %24 = sbr.rel (0) target = $region13
    $region12: #{unified_policy_forward.1} parent=1 // pred_region
      %26 = dma.done [#allocation3], 4352
    $region13: #{unified_policy_forward.1} parent=1 // pred_fallthru
      _
    %v27 = vld [vmem:[#allocation2] sm:$0xff]
    %v28 = vld [vmem:[#allocation2 + $0x8] sm:$0xff]
    %v29 = vld [vmem:[#allocation2 + $0x10] sm:$0xff]
    %v30 = vld [vmem:[#allocation2 + $0x18] sm:$0xff]
    %v31 = vld [vmem:[#allocation2 + $0x20] sm:$0xff]
    %v32 = vld [vmem:[#allocation2 + $0x28] sm:$0xff]
    %v33 = vld [vmem:[#allocation2 + $0x30] sm:$0xff]
    %v34 = vld [vmem:[#allocation2 + $0x38] sm:$0xff]
    %v35 = vld [vmem:[#allocation2 + $0x40] sm:$0xff]
    %v36 = vld [vmem:[#allocation2 + $0x48] sm:$0xff]
    %v37 = vld [vmem:[#allocation2 + $0x50] sm:$0xff]
    %v38 = vld [vmem:[#allocation2 + $0x58] sm:$0xff]
    %v39 = vld [vmem:[#allocation2 + $0x60] sm:$0xff]
    %v40 = vld [vmem:[#allocation2 + $0x68] sm:$0xff]
    %v41 = vld [vmem:[#allocation2 + $0x70] sm:$0xff]
    %v42 = vld [vmem:[#allocation2 + $0x78] sm:$0xff]
    %v43 = vld [vmem:[#allocation2 + $0x80] sm:$0xff]
    %v44 = vld [vmem:[#allocation2 + $0x88] sm:$0xff]
    %v45 = vld [vmem:[#allocation2 + $0x90] sm:$0xff]
    %v46 = vld [vmem:[#allocation2 + $0x98] sm:$0xff]
    %v47 = vld [vmem:[#allocation2 + $0xa0] sm:$0xff]
    %v48 = vld [vmem:[#allocation2 + $0xa8] sm:$0xff]
    %v49 = vld [vmem:[#allocation2 + $0xb0] sm:$0xff]
    %v50 = vld [vmem:[#allocation2 + $0xb8] sm:$0xff]
    %v51 = vld [vmem:[#allocation2 + $0xc0] sm:$0xff]
    %v52 = vld [vmem:[#allocation2 + $0xc8] sm:$0xff]
    %v53 = vld [vmem:[#allocation2 + $0xd0] sm:$0xff]
    %v54 = vld [vmem:[#allocation2 + $0xd8] sm:$0xff]
    %v55 = vld [vmem:[#allocation2 + $0xe0] sm:$0xff]
    %v56 = vld [vmem:[#allocation2 + $0xe8] sm:$0xff]
    %v57 = vld [vmem:[#allocation2 + $0xf0] sm:$0xff]
    %v58 = vld [vmem:[#allocation2 + $0xf8] sm:$0xff]
    %v59 = vld [vmem:[#allocation2 + $0x100] sm:$0xff]
    %v60 = vld [vmem:[#allocation2 + $0x108] sm:$0x1]
    %v61 = vld [vmem:[#allocation2 + $0x109] sm:$0x1]
    %v62 = vld [vmem:[%s0] sm:$0xff]
    %vm63 = vcmask 64512
    %v65 = vsel %vm63, %v62, 0
    %67 = vmatpush.msra.mxu0 0.0
    %68 = vmatpush.msra.mxu0 0.0
    %69 = vmatpush.msra.mxu0 0.0
    %70 = vmatpush.msra.mxu0 0.0
    %71 = vmatpush.msra.mxu0 0.0
    %72 = vmatpush.msra.mxu0 0.0
    %73 = vmatpush.msra.mxu0 0.0
    %74 = vmatpush.msra.mxu0 0.0
    %75 = vmatpush.msra.mxu0 0.0
    %76 = vmatpush.msra.mxu0 0.0
    %77 = vmatpush.msra.mxu0 0.0
    %78 = vmatpush.msra.mxu0 0.0
    %79 = vmatpush.msra.mxu0 0.0
    %80 = vmatpush.msra.mxu0 0.0
    %81 = vmatpush.msra.mxu0 0.0
    %82 = vmatpush.msra.mxu0 %v27
    %83 = vmatmul.f32.gmra.mxu0 %v65
    %v84 = vpop.f32.mrf.mxu0
    %v85 = vadd.f32 0.0, %v84
    %86 = vdwg.mxu0
    %v87 = vmax.f32 %v85, 0.0
    %v88 = vperm.slane %v60, 0
    %89 = vmatpush.msra.mxu0 %v43
    %90 = vmatpush.msra.mxu0 %v42
    %91 = vmatpush.msra.mxu0 %v41
    %92 = vmatpush.msra.mxu0 %v40
    %93 = vmatpush.msra.mxu0 %v39
    %94 = vmatpush.msra.mxu0 %v38
    %95 = vmatpush.msra.mxu0 %v37
    %96 = vmatpush.msra.mxu0 %v36
    %97 = vmatpush.msra.mxu0 %v35
    %98 = vmatpush.msra.mxu0 %v34
    %99 = vmatpush.msra.mxu0 %v33
    %100 = vmatpush.msra.mxu0 %v32
    %101 = vmatpush.msra.mxu0 %v31
    %102 = vmatpush.msra.mxu0 %v30
    %103 = vmatpush.msra.mxu0 %v29
    %104 = vmatpush.msra.mxu0 %v28
    %105 = vmatmul.f32.gmra.mxu0 %v87
    %v106 = vpop.f32.mrf.mxu0
    %v107 = vadd.f32 %v88, %v106
    %108 = vdwg.mxu0
    %v109 = vmax.f32 %v107, 0.0
    %110 = vmatpush.msra.mxu0 %v59
    %111 = vmatpush.msra.mxu0 %v58
    %112 = vmatpush.msra.mxu0 %v57
    %113 = vmatpush.msra.mxu0 %v56
    %114 = vmatpush.msra.mxu0 %v55
    %115 = vmatpush.msra.mxu0 %v54
    %116 = vmatpush.msra.mxu0 %v53
    %117 = vmatpush.msra.mxu0 %v52
    %118 = vmatpush.msra.mxu0 %v51
    %119 = vmatpush.msra.mxu0 %v50
    %120 = vmatpush.msra.mxu0 %v49
    %121 = vmatpush.msra.mxu0 %v48
    %122 = vmatpush.msra.mxu0 %v47
    %123 = vmatpush.msra.mxu0 %v46
    %124 = vmatpush.msra.mxu0 %v45
    %125 = vmatpush.msra.mxu0 %v44
    %126 = vmatmul.f32.gmra.mxu0 %v109
    %v127 = vpop.f32.mrf.mxu0
    %v128 = vadd.f32 0.0, %v127
    %129 = vdwg.mxu0
    %v130 = vperm.slane %v61, 0
    %v131 = vadd.f32 %v128, %v130
    %v132 = vsel %vm63, %v131, -inf
    %133 = vmax.xlane.f32.xlu0 %v132
    %v134 = vpop.xlane.xlu0 %133
    %v135 = vsub.f32 %v131, %v134
    %v136 = vmul.f32 %v135, 1.442695
    %v137 = vpow.pop %v136
    %v138 = vsel %vm63, %v137, 0.0
    %139 = vadd.xlane.f32.xlu0 %v138
    %v140 = vpop.xlane.xlu0 %139
    %v141 = vrcp.pop %v140
    %v142 = vmul.f32 %v140, %v141
    %v143 = vsub.f32 1.0, %v142
    %v144 = vmul.f32 %v141, %v143
    %v145 = vadd.f32 %v141, %v144
    %vm146 = vweird.f32 %v140
    %vm147 = vweird.f32 %v141
    %vm148 = vmor %vm146, %vm147
    %v149 = vsel %vm148, %v141, %v145
    %v150 = vand.u32 2147483647, %v140
    %vm151 = vcmp.eq.f32.partialorder %v150, 8.507059e+37
    %v152 = vand.u32 %v140, 2147483648
    %v153 = vor.u32 1.1754944e-38, %v152
    %v154 = vsel %vm151, %v153, %v149
    %v155 = vmul.f32 %v137, %v154
    %156 = vst.msk [vmem:[%s2] sm:$0xff] %vm63, %v155
    // Predicated region
    $region14: #{unified_policy_forward.1} parent=1 // pred_check
      _
    $region15: #{unified_policy_forward.1} parent=1 // pred_check_branch
      %158 = sbr.rel (0) target = $region17
    $region16: #{unified_policy_forward.1} parent=1 // pred_region
      _
    $region17: #{unified_policy_forward.1} parent=1 // pred_fallthru
      _
    // Predicated region
    $region18: #{unified_policy_forward.1} parent=1 // pred_check
      _
    $region19: #{unified_policy_forward.1} parent=1 // pred_check_branch
      %160 = sbr.rel (0) target = $region21
    $region20: #{unified_policy_forward.1} parent=1 // pred_region
      _
    $region21: #{unified_policy_forward.1} parent=1 // pred_fallthru
      _
    %161 = vsyncpa [#allocation3], 1

</llo_original>
